<compile_context>
chip_gen: v5e
topology: v5e:2x2
jax: 0.10.0
libtpu: 0.0.40
codegen_flags: <defaults>
</compile_context>

<pallas_src>
import functools

import numpy as np

import jax
import jax.numpy as jnp
from jax.experimental import pallas as pl
from jax.experimental.pallas import tpu as pltpu

_MIB = 1024 * 1024


def _round_up(x, m):
    return (x + m - 1) // m * m


# ----------------------------------------------------------------------------
# Kernels
# ----------------------------------------------------------------------------
def _featpool_vpu_kernel(x_ref, w_ref, b_ref, o_ref, *, k):
    """Pointwise conv + ReLU + (non-overlapping or identity) average pool.

    x_ref: (Bb, T, C_in)       input features, time on sublanes / C on lanes
    w_ref: (C_in, H_pad)       conv weight (transposed, lane padded)
    b_ref: (1, H_pad)          conv bias (f32)
    o_ref: (Bb, t_out, H_pad)  pooled output tile
    Static k == stride (s == k), or k == 1 for the identity ('didemo') pool.
    """
    bb, t, c_in = x_ref.shape
    h_pad = w_ref.shape[1]
    t_out = o_ref.shape[1]

    # Conv1d(kernel=1) == one MXU matmul with M = Bb*T, f32 accumulation.
    x2 = x_ref[...].reshape(bb * t, c_in)
    y = jnp.dot(x2, w_ref[...], preferred_element_type=jnp.float32)
    y = jnp.maximum(y + b_ref[...], 0.0)                      # bias + ReLU (f32)

    if k == 1:
        # Identity pool ('didemo'): no pooling work at all.
        pooled = y.reshape(bb, t, h_pad)
    else:
        # stride == kernel_size: pool as a k-wide sublane sum on the VPU.
        if t % k == 0:
            pooled = y.reshape(bb * t_out, k, h_pad).sum(axis=1)
        else:  # trailing rows that don't form a full window are dropped
            y3 = y.reshape(bb, t, h_pad)[:, : t_out * k, :]
            pooled = y3.reshape(bb * t_out, k, h_pad).sum(axis=1)
        pooled = (pooled * (1.0 / k)).reshape(bb, t_out, h_pad)

    o_ref[...] = pooled.astype(o_ref.dtype)


def _featpool_matmul_kernel(x_ref, w_ref, b_ref, p_ref, o_ref):
    """Pointwise conv + ReLU + general (overlapping/gapped) average pool.

    p_ref: (Bb*t_out, Bb*T) block-diagonal pool matrix -> ONE MXU matmul with
    M = Bb*t_out instead of Bb pushes with M = t_out.
    """
    bb, t, c_in = x_ref.shape
    h_pad = w_ref.shape[1]
    t_out = o_ref.shape[1]

    x2 = x_ref[...].reshape(bb * t, c_in)
    y = jnp.dot(x2, w_ref[...], preferred_element_type=jnp.float32)
    y = jnp.maximum(y + b_ref[...], 0.0)                      # (Bb*T, H_pad)

    pooled = jnp.dot(p_ref[...], y, preferred_element_type=jnp.float32)
    o_ref[...] = pooled.reshape(bb, t_out, h_pad).astype(o_ref.dtype)


# ----------------------------------------------------------------------------
# Per-chip tuning + block-batch chooser
# ----------------------------------------------------------------------------
def _chip_vmem_params():
    """Derive VMEM budget / limit / megacore hint from the local chip."""
    cap = 64 * _MIB
    try:
        info = pltpu.get_tpu_info()
        cap = int(getattr(info, "vmem_capacity_bytes", cap)) or cap
    except Exception:
        pass
    if cap >= 100 * _MIB:
        # 128 MiB parts (v5e / v6e): single TensorCore, mem-bound -> big blocks,
        # no need to keep multiple grid steps alive.
        return dict(vmem_budget=56 * _MIB, vmem_limit=96 * _MIB,
                    two_tensorcores=False, target_m=1024)
    # 64 MiB parts (v7x): leave headroom and keep >= 2 grid steps so both
    # TensorCores get work via the "parallel" grid axis.
    return dict(vmem_budget=20 * _MIB, vmem_limit=56 * _MIB,
                two_tensorcores=True, target_m=512)


def _choose_block_batch(B, T, C_in, H_pad, t_out, in_itemsize, out_itemsize,
                        *, target_m, vmem_budget, pool_needs_matrix,
                        two_tensorcores):
    """Pick how many batch elements to fold into each grid step."""
    if T % 8 != 0:
        return 1                              # keep in-kernel reshapes layout-trivial

    ideal = max(1, -(-target_m // T))         # fill the MXU M dimension
    if two_tensorcores and B >= 2:
        ideal = min(ideal, -(-B // 2))        # keep >= 2 parallel steps (v7x only)
    ideal = min(ideal, B)

    # Constant-index operands are still double-buffered by the pipeline; count
    # them (conservatively, 2 buffers) instead of pretending they are free.
    w_bytes = C_in * H_pad * in_itemsize
    b_bytes = H_pad * 4

    def fits(bb):
        x_blk = bb * T * C_in * in_itemsize
        o_blk = bb * t_out * H_pad * out_itemsize
        p_blk = (bb * t_out) * (bb * T) * 4 if pool_needs_matrix else 0
        return 2 * (x_blk + o_blk + w_bytes + b_bytes + p_blk) <= vmem_budget

    for bb in range(ideal, 0, -1):
        if B % bb == 0 and fits(bb):
            return bb
    return 1


# ----------------------------------------------------------------------------
# Wrapper (FeatAvgPool.forward equivalent)
# ----------------------------------------------------------------------------
def feat_avg_pool(x, weight, bias, *, kernel_size, stride, dataset=None):
    """JAX/Pallas equivalent of FeatAvgPool.forward.

    x:      (B, T, C_in)   -- same as the PyTorch module input x_
    weight: (H, C_in)      -- nn.Conv1d(input_size, hidden_size, 1).weight squeezed
    bias:   (H,)           -- nn.Conv1d bias
    Returns [out] with out of shape (B, H, T_out) (PyTorch NCW layout),
    T_out = (T - kernel_size) // stride + 1, or T if dataset == 'didemo'.
    """
    x = jnp.asarray(x)                        # keep the input dtype (no f32 upcast)
    B, T, C_in = x.shape
    H = weight.shape[0]
    dtype = x.dtype

    if dataset in {"didemo"}:
        k, s = 1, 1                           # identity pool
    else:
        k, s = int(kernel_size), int(stride)
        if T < k:
            raise ValueError(f"T={T} must be >= kernel_size={k}")
    t_out = (T - k) // s + 1

    # Lane-dense parameter / output padding (no-op when H % 128 == 0).
    # TODO(synk): for very small H the unpadded masked-store output may write
    # fewer HBM bytes; benchmark before switching.
    H_pad = _round_up(H, 128)
    w_t = jnp.zeros((C_in, H_pad), dtype).at[:, :H].set(jnp.asarray(weight, dtype).T)
    b2 = jnp.zeros((1, H_pad), jnp.float32).at[0, :H].set(jnp.asarray(bias, jnp.float32))

    # Pooling strategy: identity / VPU sublane-sum / block-diagonal matmul.
    use_matmul_pool = not (k == 1 and s == 1) and (s != k)

    tune = _chip_vmem_params()
    bb = _choose_block_batch(
        B, T, C_in, H_pad, t_out,
        jnp.dtype(dtype).itemsize, jnp.dtype(dtype).itemsize,
        target_m=tune["target_m"], vmem_budget=tune["vmem_budget"],
        pool_needs_matrix=use_matmul_pool,
        two_tensorcores=tune["two_tensorcores"])
    grid = (B // bb,)

    in_specs = [
        pl.BlockSpec((bb, T, C_in), lambda g: (g, 0, 0)),
        pl.BlockSpec((C_in, H_pad), lambda g: (0, 0)),
        pl.BlockSpec((1, H_pad), lambda g: (0, 0)),
    ]
    args = [x, w_t, b2]

    if use_matmul_pool:
        # Block-diagonal pool matrix: one MXU push with M = bb*t_out per step.
        p_np = np.zeros((bb * t_out, bb * T), np.float32)
        for b_i in range(bb):
            for o in range(t_out):
                p_np[b_i * t_out + o,
                     b_i * T + o * s: b_i * T + o * s + k] = 1.0 / k
        in_specs.append(pl.BlockSpec((bb * t_out, bb * T), lambda g: (0, 0)))
        args.append(jnp.asarray(p_np))
        kernel = _featpool_matmul_kernel
    else:
        kernel = functools.partial(_featpool_vpu_kernel, k=k)

    out_bth = pl.pallas_call(
        kernel,
        out_shape=jax.ShapeDtypeStruct((B, t_out, H_pad), dtype),
        grid_spec=pltpu.PrefetchScalarGridSpec(
            num_scalar_prefetch=0,
            grid=grid,
            in_specs=in_specs,
            out_specs=pl.BlockSpec((bb, t_out, H_pad), lambda g: (g, 0, 0)),
        ),
        compiler_params=pltpu.CompilerParams(
            dimension_semantics=("parallel",),
            vmem_limit_bytes=tune["vmem_limit"],
        ),
    )(*args)

    # Drop lane padding and return the PyTorch NCW layout (B, H, T_out).
    out = jnp.transpose(out_bth[:, :, :H], (0, 2, 1))
    return [out]


# ----------------------------------------------------------------------------
# Pure-JAX reference matching the PyTorch semantics
# ----------------------------------------------------------------------------
def _reference(x, weight, bias, *, kernel_size, stride, dataset=None):
    y = jnp.einsum("btc,hc->bht", x, weight) + bias[None, :, None]
    y = jnp.maximum(y, 0.0)
    if dataset in {"didemo"}:
        return [y]
    T = y.shape[-1]
    t_out = (T - kernel_size) // stride + 1
    pooled = jnp.stack(
        [y[..., o * stride: o * stride + kernel_size].mean(-1)
         for o in range(t_out)],
        axis=-1,
    )
    return [pooled]


if __name__ == "__main__":
    # Small shapes consistent with the module's forward: x_: (batch, seq, input_size)
    B, T, C_in, H = 2, 16, 32, 32

    key = jax.random.PRNGKey(0)
    kx, kw, kb = jax.random.split(key, 3)
    x = jax.random.normal(kx, (B, T, C_in), dtype=jnp.float32)
    weight = jax.random.normal(kw, (H, C_in), dtype=jnp.float32) * 0.1
    bias = jax.random.normal(kb, (H,), dtype=jnp.float32) * 0.1

    # 1) Common case: stride == kernel_size  (VPU pooling path).
    k, s = 2, 2
    out = feat_avg_pool(x, weight, bias, kernel_size=k, stride=s, dataset=None)
    out = [jax.block_until_ready(o) for o in out]
    ref = _reference(x, weight, bias, kernel_size=k, stride=s, dataset=None)
    assert out[0].shape == (B, H, (T - k) // s + 1), out[0].shape
    assert jnp.allclose(out[0], ref[0], atol=1e-5, rtol=1e-5), "mismatch (s==k)"

    # 2) 'didemo' identity-pool path (no pooling work in the kernel).
    out_dd = feat_avg_pool(x, weight, bias, kernel_size=k, stride=s,
                           dataset="didemo")
    out_dd = [jax.block_until_ready(o) for o in out_dd]
    ref_dd = _reference(x, weight, bias, kernel_size=k, stride=s,
                        dataset="didemo")
    assert out_dd[0].shape == (B, H, T)
    assert jnp.allclose(out_dd[0], ref_dd[0], atol=1e-5, rtol=1e-5), "mismatch (didemo)"

    # 3) Overlapping windows: stride < kernel_size  (block-diag matmul path).
    k2, s2 = 4, 2
    out_ov = feat_avg_pool(x, weight, bias, kernel_size=k2, stride=s2,
                           dataset=None)
    out_ov = [jax.block_until_ready(o) for o in out_ov]
    ref_ov = _reference(x, weight, bias, kernel_size=k2, stride=s2,
                        dataset=None)
    assert out_ov[0].shape == (B, H, (T - k2) // s2 + 1)
    assert jnp.allclose(out_ov[0], ref_ov[0], atol=1e-5, rtol=1e-5), "mismatch (overlap)"

    print("KERNEL_OK")
</pallas_src>

<mosaic_0001>
module attributes {stable_mosaic.version = 11 : i64} {
  func.func @_featpool_vpu_kernel(%arg0: i32, %arg1: memref<1x16x32xf32, #tpu.memory_space<vmem>>, %arg2: memref<32x128xf32, #tpu.memory_space<vmem>>, %arg3: memref<1x128xf32, #tpu.memory_space<vmem>>, %arg4: memref<1x8x128xf32, #tpu.memory_space<vmem>>) attributes {dimension_semantics = [#tpu.dimension_semantics<parallel>], iteration_bounds = array<i64: 2>, scalar_prefetch = 0 : i64, scratch_operands = 0 : i64, tpu.core_type = #tpu.core_type<tc>, window_params = [{transform_indices = @transform_0, window_bounds = array<i64: 1, 16, 32>}, {pipeline_mode = #tpu.pipeline_mode<synchronous>, transform_indices = @transform_1, window_bounds = array<i64: 32, 128>}, {pipeline_mode = #tpu.pipeline_mode<synchronous>, transform_indices = @transform_2, window_bounds = array<i64: 1, 128>}, {transform_indices = @transform_3, window_bounds = array<i64: 1, 8, 128>}]} {
    %c0 = arith.constant 0 : index
    %c0_0 = arith.constant 0 : index
    %c0_1 = arith.constant 0 : index
    %0 = vector.load %arg1[%c0, %c0_0, %c0_1] : memref<1x16x32xf32, #tpu.memory_space<vmem>>, vector<1x16x32xf32>
    %1 = vector.shape_cast %0 : vector<1x16x32xf32> to vector<16x32xf32>
    %c0_2 = arith.constant 0 : index
    %c0_3 = arith.constant 0 : index
    %2 = vector.load %arg2[%c0_2, %c0_3] : memref<32x128xf32, #tpu.memory_space<vmem>>, vector<32x128xf32>
    %cst = arith.constant dense<0.000000e+00> : vector<16x128xf32>
    %3 = tpu.matmul %1, %2, %cst {dimension_numbers = #tpu.dot_dimension_numbers<[1], [0], [0], [1], [0, 0, 1, 1], [], []>} : vector<16x32xf32>, vector<32x128xf32>, vector<16x128xf32> -> vector<16x128xf32>
    %c0_4 = arith.constant 0 : index
    %c0_5 = arith.constant 0 : index
    %4 = vector.load %arg3[%c0_4, %c0_5] : memref<1x128xf32, #tpu.memory_space<vmem>>, vector<1x128xf32>
    %5 = vector.broadcast %4 : vector<1x128xf32> to vector<16x128xf32>
    %6 = arith.addf %3, %5 : vector<16x128xf32>
    %cst_6 = arith.constant 0.000000e+00 : f32
    %7 = vector.broadcast %cst_6 : f32 to vector<16x128xf32>
    %8 = arith.maximumf %6, %7 : vector<16x128xf32>
    %9 = vector.shape_cast %8 : vector<16x128xf32> to vector<8x2x128xf32>
    %cst_7 = arith.constant dense<0.000000e+00> : vector<8x128xf32>
    %10 = vector.multi_reduction <add>, %9, %cst_7 [1] : vector<8x2x128xf32> to vector<8x128xf32>
    %cst_8 = arith.constant 5.000000e-01 : f32
    %11 = vector.broadcast %cst_8 : f32 to vector<8x128xf32>
    %12 = arith.mulf %10, %11 : vector<8x128xf32>
    %13 = vector.shape_cast %12 : vector<8x128xf32> to vector<1x8x128xf32>
    %c0_9 = arith.constant 0 : index
    %c0_10 = arith.constant 0 : index
    %c0_11 = arith.constant 0 : index
    %14 = vector.load %arg4[%c0_9, %c0_10, %c0_11] : memref<1x8x128xf32, #tpu.memory_space<vmem>>, vector<1x8x128xf32>
    tpu.vector_store %arg4[%c0_9, %c0_10, %c0_11], %13 {strides = array<i32>} : memref<1x8x128xf32, #tpu.memory_space<vmem>>, vector<1x8x128xf32>,
    return
  }
  func.func @transform_0(%arg0: i32) -> (i32, i32, i32) {
    %c0_i32 = arith.constant 0 : i32
    %c0_i32_0 = arith.constant 0 : i32
    %c0_i32_1 = arith.constant 0 : i32
    return %arg0, %c0_i32, %c0_i32_0 : i32, i32, i32
  }
  func.func @transform_1(%arg0: i32) -> (i32, i32) {
    %c0_i32 = arith.constant 0 : i32
    %c0_i32_0 = arith.constant 0 : i32
    %c0_i32_1 = arith.constant 0 : i32
    return %c0_i32, %c0_i32_0 : i32, i32
  }
  func.func @transform_2(%arg0: i32) -> (i32, i32) {
    %c0_i32 = arith.constant 0 : i32
    %c0_i32_0 = arith.constant 0 : i32
    %c0_i32_1 = arith.constant 0 : i32
    return %c0_i32, %c0_i32_0 : i32, i32
  }
  func.func @transform_3(%arg0: i32) -> (i32, i32, i32) {
    %c0_i32 = arith.constant 0 : i32
    %c0_i32_0 = arith.constant 0 : i32
    %c0_i32_1 = arith.constant 0 : i32
    return %arg0, %c0_i32, %c0_i32_0 : i32, i32, i32
  }
}

</mosaic_0001>

<llo_original>
// kernel: tpu_custom_call.1
$region0: #{tpu_custom_call.1}
  #allocation0 [shape = 'u32[]', space=smem, size = 0x4, offset = 0x4, fixed_abs, tag = 'smem constant byte address 0x4 - core index']
  #allocation1 [shape = 'u32[72,128]{1,0:T(1,128)}', space=vmem, size = 0x9000, scoped, tag = 'internal scratch']
  %s0 = inlined_call_operand.hbm [shape: f32[2,16,32], index: 0, kind: input, shape index: {}]
  %s1 = inlined_call_operand.hbm [shape: f32[32,128], index: 1, kind: input, shape index: {}]
  %s2 = inlined_call_operand.vmem [shape: f32[1,128], index: 2, kind: input, shape index: {}]
  %s3 = inlined_call_operand.hbm [shape: f32[2,8,128], index: 3, kind: output, shape index: {}]
  %s4 = sld [smem:[#allocation0]]
  $region53: #{tpu_custom_call.1} parent=0
    _
  %s6 = ssub.s32 1, %s4
  %s7 = scalar_select 0, %s6, %s4
  $region1: #{tpu_custom_call.1} parent=0
    #allocation2 [shape = 'u8[16384]{0}', space=vmem, size = 0x4000, scoped, tag = 'input window, operand 0']
    #allocation3 [shape = 's32[2]{0}', space=sflag, size = 0x8, scoped, tag = 'scoped memory for tpu_custom_call.1']
    #allocation4 [shape = 's32[2]{0}', space=sflag, size = 0x8, scoped, tag = 'scoped memory for tpu_custom_call.1']
    #allocation5 [shape = 'u8[16384]{0}', space=vmem, size = 0x4000, scoped, tag = 'input window, operand 1, single buffered']
    #allocation6 [shape = 's32[1]{0}', space=sflag, size = 0x4, scoped, tag = 'scoped memory for tpu_custom_call.1']
    #allocation7 [shape = 'u8[8192]{0}', space=vmem, size = 0x2000, scoped, tag = 'output window, operand 0']
    %8 = vsyncpa [#allocation3], 0
    %s9 = scalar_lea.sflag [#allocation3], 1
    %10 = vsyncpa %s9, 0
    %11 = vsyncpa [#allocation6], 0
    %12 = vsyncpa [#allocation4], 0
    %s13 = scalar_lea.sflag [#allocation4], 1
    %14 = vsyncpa %s13, 0
    loop: start=0, step=1, limit=4
    $region2: #{tpu_custom_call.1} parent=1 // loop_pre_header
      _
    $region3: #{tpu_custom_call.1} parent=1 // loop_header
      %s16 = sphi 0, %s20
      %p17 = scmp.ge.s32.totalorder %s16, 4
      %s26 = sphi 0, %s28
      %s29 = sphi 0, %s26
      %s30 = sphi 0, %s29
      %s46 = sphi 0, %s30
      %s50 = sphi 0, %s50
      %s52 = sphi 0, %s50
      %s53 = sphi 0, %s52
      %s67 = sphi 0, %s53
      %s71 = sphi 0, %s71
      %s73 = sphi 0, %s71
      %s74 = sphi 0, %s73
      %s88 = sphi 0, %s74
      %s94 = sphi 0, %s96
      %s97 = sphi 0, %s94
      %s98 = sphi 0, %s97
      %s114 = sphi 0, %s98
    $region4: #{tpu_custom_call.1} parent=1 // loop_header_branch
      %19 = sbr.rel (%p17) target = $region8
    $region5: #{tpu_custom_call.1} parent=1 // loop_body
      %s21 = ssub.s32 %s16, 1
      %s22 = ssub.s32 %s16, 2
      %s23 = sadd.s32 %s16, 1
      %s24 = ssub.s32 %s16, %s23
      %p25 = scmp.eq.s32.totalorder %s24, 0
      %s27 = sadd.s32 %s26, 1
      %s28 = scalar_select %p25, %s26, %s27
      %p31 = pneg %p25
      %p32 = scmp.eq.s32.totalorder %s16, 1
      %p33 = por %p31, %p32
      %p34 = scmp.ne.s32.totalorder %s26, %s29
      %p35 = scmp.eq.s32.totalorder %s16, 0
      %p36 = por %p34, %p35
      %p37 = scmp.ne.s32.totalorder %s26, %s29
      %p38 = scmp.eq.s32.totalorder %s21, 1
      %p39 = por %p37, %p38
      %p40 = scmp.ne.s32.totalorder %s29, %s30
      %p41 = scmp.eq.s32.totalorder %s21, 0
      %p42 = por %p40, %p41
      %p43 = scmp.ne.s32.totalorder %s29, %s30
      %p44 = scmp.eq.s32.totalorder %s22, 1
      %p45 = por %p43, %p44
      %p47 = scmp.ne.s32.totalorder %s30, %s46
      %p48 = scmp.eq.s32.totalorder %s22, 0
      %p49 = por %p47, %p48
      %s51 = sadd.s32 %s50, 1
      %p54 = scmp.eq.s32.totalorder %s16, 1
      %p55 = scmp.ne.s32.totalorder %s50, %s52
      %p56 = scmp.eq.s32.totalorder %s16, 0
      %p57 = por %p55, %p56
      %p58 = scmp.ne.s32.totalorder %s50, %s52
      %p59 = scmp.eq.s32.totalorder %s21, 1
      %p60 = por %p58, %p59
      %p61 = scmp.ne.s32.totalorder %s52, %s53
      %p62 = scmp.eq.s32.totalorder %s21, 0
      %p63 = por %p61, %p62
      %p64 = scmp.ne.s32.totalorder %s52, %s53
      %p65 = scmp.eq.s32.totalorder %s22, 1
      %p66 = por %p64, %p65
      %p68 = scmp.ne.s32.totalorder %s53, %s67
      %p69 = scmp.eq.s32.totalorder %s22, 0
      %p70 = por %p68, %p69
      %s72 = sadd.s32 %s71, 1
      %p75 = scmp.eq.s32.totalorder %s16, 1
      %p76 = scmp.ne.s32.totalorder %s71, %s73
      %p77 = scmp.eq.s32.totalorder %s16, 0
      %p78 = por %p76, %p77
      %p79 = scmp.ne.s32.totalorder %s71, %s73
      %p80 = scmp.eq.s32.totalorder %s21, 1
      %p81 = por %p79, %p80
      %p82 = scmp.ne.s32.totalorder %s73, %s74
      %p83 = scmp.eq.s32.totalorder %s21, 0
      %p84 = por %p82, %p83
      %p85 = scmp.ne.s32.totalorder %s73, %s74
      %p86 = scmp.eq.s32.totalorder %s22, 1
      %p87 = por %p85, %p86
      %p89 = scmp.ne.s32.totalorder %s74, %s88
      %p90 = scmp.eq.s32.totalorder %s22, 0
      %p91 = por %p89, %p90
      %s92 = ssub.s32 %s16, %s23
      %p93 = scmp.eq.s32.totalorder %s92, 0
      %s95 = sadd.s32 %s94, 1
      %s96 = scalar_select %p93, %s94, %s95
      %p99 = pneg %p93
      %p100 = scmp.eq.s32.totalorder %s16, 1
      %p101 = por %p99, %p100
      %p102 = scmp.ne.s32.totalorder %s94, %s97
      %p103 = scmp.eq.s32.totalorder %s16, 0
      %p104 = por %p102, %p103
      %p105 = scmp.ne.s32.totalorder %s94, %s97
      %p106 = scmp.eq.s32.totalorder %s21, 1
      %p107 = por %p105, %p106
      %p108 = scmp.ne.s32.totalorder %s97, %s98
      %p109 = scmp.eq.s32.totalorder %s21, 0
      %p110 = por %p108, %p109
      %p111 = scmp.ne.s32.totalorder %s97, %s98
      %p112 = scmp.eq.s32.totalorder %s22, 1
      %p113 = por %p111, %p112
      %p115 = scmp.ne.s32.totalorder %s98, %s114
      %p116 = scmp.eq.s32.totalorder %s22, 0
      %p117 = por %p115, %p116
      %p118 = scmp.le.s32.totalorder 1, %s16
      %p119 = scmp.lt.s32.totalorder %s16, 3
      %p120 = pnand %p118, %p119
      %p121 = pneg %p120
      // Predicated region
      $region9: #{tpu_custom_call.1} parent=5 // pred_check
        _
      $region10: #{tpu_custom_call.1} parent=5 // pred_check_branch
        %123 = sbr.rel (%p120) target = $region12
      $region11: #{tpu_custom_call.1} parent=5 // pred_region
        %s124 = ssub.s32 %s16, 1
        // Predicated region
        $region13: #{tpu_custom_call.1} parent=11 // pred_check
          %p125 = pneg %p63
        $region14: #{tpu_custom_call.1} parent=11 // pred_check_branch
          %127 = sbr.rel (%p125) target = $region16
        $region15: #{tpu_custom_call.1} parent=11 // pred_region
          %129 = vsyncadd [#allocation6], 0
          %s130 = sshll.u32 %s1, 4
          %s131 = int_to_ptr.hbm [resolvable:$true] %s130
          %s132 = sshll.u32 [#allocation5], 4
          %s133 = int_to_ptr.vmem [resolvable:$true] %s132
          %138 = dma.hbm_to_vmem [thread:$0]  %s131, 512, %s133, [#allocation6], 128, 128, 8
        $region16: #{tpu_custom_call.1} parent=11 // pred_fallthru
          _
        // Predicated region
        $region17: #{tpu_custom_call.1} parent=11 // pred_check
          %p139 = pneg %p84
        $region18: #{tpu_custom_call.1} parent=11 // pred_check_branch
          %141 = sbr.rel (%p139) target = $region20
        $region19: #{tpu_custom_call.1} parent=11 // pred_region
          _
        $region20: #{tpu_custom_call.1} parent=11 // pred_fallthru
          _
      $region12: #{tpu_custom_call.1} parent=5 // pred_fallthru
        _
      %p142 = scmp.lt.s32.totalorder %s16, 2
      // Predicated region
      $region21: #{tpu_custom_call.1} parent=5 // pred_check
        %p143 = pneg %p142
      $region22: #{tpu_custom_call.1} parent=5 // pred_check_branch
        %145 = sbr.rel (%p143) target = $region24
      $region23: #{tpu_custom_call.1} parent=5 // pred_region
        // Predicated region
        $region25: #{tpu_custom_call.1} parent=23 // pred_check
          %p146 = pneg %p36
        $region26: #{tpu_custom_call.1} parent=23 // pred_check_branch
          %148 = sbr.rel (%p146) target = $region28
        $region27: #{tpu_custom_call.1} parent=23 // pred_region
          %s149 = sand.u32 %s26, 1
          %s150 = scalar_lea.sflag [#allocation3], %s149
          %s151 = sand.u32 %s26, 1
          %s152 = smul.addr %s151, 16
          %s153 = scalar_lea.vmem [#allocation2], %s152
          %155 = vsyncadd %s150, 0
          %s156 = smul.addr %s16, 2
          %s157 = smul.addr %s156, 8
          %s158 = scalar_lea.hbm %s0, %s157
          %s159 = sshll.u32 %s158, 4
          %s160 = int_to_ptr.hbm [resolvable:$true] %s159
          %s161 = sshll.u32 %s153, 4
          %s162 = int_to_ptr.vmem [resolvable:$true] %s161
          %167 = dma.hbm_to_vmem [thread:$0]  %s160, 256, %s162, %s150, 128, 128, 8
        $region28: #{tpu_custom_call.1} parent=23 // pred_fallthru
          _
      $region24: #{tpu_custom_call.1} parent=5 // pred_fallthru
        _
      %p168 = scmp.le.s32.totalorder 1, %s16
      %p169 = scmp.lt.s32.totalorder %s16, 3
      %p170 = pnand %p168, %p169
      %p171 = pneg %p170
      // Predicated region
      $region29: #{tpu_custom_call.1} parent=5 // pred_check
        _
      $region30: #{tpu_custom_call.1} parent=5 // pred_check_branch
        %173 = sbr.rel (%p170) target = $region32
      $region31: #{tpu_custom_call.1} parent=5 // pred_region
        %s174 = ssub.s32 %s16, 1
        %s175 = sand.u32 %s29, 1
        %s176 = scalar_lea.sflag [#allocation3], %s175
        %s177 = sand.u32 %s29, 1
        %s178 = smul.addr %s177, 16
        %s179 = scalar_lea.vmem [#allocation2], %s178
        // Predicated region
        $region33: #{tpu_custom_call.1} parent=31 // pred_check
          %p180 = pneg %p42
        $region34: #{tpu_custom_call.1} parent=31 // pred_check_branch
          %182 = sbr.rel (%p180) target = $region36
        $region35: #{tpu_custom_call.1} parent=31 // pred_region
          %184 = dma.done %s176, 256
        $region36: #{tpu_custom_call.1} parent=31 // pred_fallthru
          _
        // Predicated region
        $region37: #{tpu_custom_call.1} parent=31 // pred_check
          %p185 = pneg %p63
        $region38: #{tpu_custom_call.1} parent=31 // pred_check_branch
          %187 = sbr.rel (%p185) target = $region40
        $region39: #{tpu_custom_call.1} parent=31 // pred_region
          %189 = dma.done [#allocation6], 512
        $region40: #{tpu_custom_call.1} parent=31 // pred_fallthru
          _
        %s190 = sand.u32 %s29, 1
        %s191 = scalar_lea.sflag [#allocation3], %s190
        %s192 = sand.u32 %s29, 1
        %s193 = smul.addr %s192, 16
        %s194 = scalar_lea.vmem [#allocation2], %s193
        %p195 = pneg %p42
        %p196 = pneg %p39
        %p197 = pneg %p63
        %p198 = pneg %p60
        %p199 = pneg %p84
        %p200 = pneg %p81
        %p201 = pneg %p110
        %p202 = pneg %p107
        %s203 = sand.u32 %s97, 1
        %s204 = scalar_lea.sflag [#allocation4], %s203
        %s205 = sand.u32 %s97, 1
        %s206 = smul.addr %s205, 8
        %s207 = scalar_lea.vmem [#allocation7], %s206
        %v208 = vld [vmem:[%s179] sm:$0xff]
        %v209 = vld [vmem:[%s179 + $0x8] sm:$0xff]
        %v210 = vld [vmem:[#allocation5] sm:$0xff]
        %v211 = vld [vmem:[#allocation5 + $0x8] sm:$0xff]
        %v212 = vld [vmem:[#allocation5 + $0x10] sm:$0xff]
        %v213 = vld [vmem:[#allocation5 + $0x18] sm:$0xff]
        %v214 = vld [vmem:[%s2] sm:$0x1]
        %v216 = vperm.slane %v214, 0
        %vm218 = vcmask 261120
        %v220 = vsel %vm218, %v208, 0
        %v223 = vsel %vm218, %v209, 0
        %225 = vmatpush.msra.mxu0 0.0
        %226 = vmatpush.msra.mxu0 0.0
        %227 = vmatpush.msra.mxu0 0.0
        %228 = vmatpush.msra.mxu0 0.0
        %229 = vmatpush.msra.mxu0 0.0
        %230 = vmatpush.msra.mxu0 0.0
        %231 = vmatpush.msra.mxu0 0.0
        %232 = vmatpush.msra.mxu0 0.0
        %233 = vmatpush.msra.mxu0 0.0
        %234 = vmatpush.msra.mxu0 0.0
        %235 = vmatpush.msra.mxu0 0.0
        %236 = vmatpush.msra.mxu0 0.0
        %237 = vmatpush.msra.mxu0 %v213
        %238 = vmatpush.msra.mxu0 %v212
        %239 = vmatpush.msra.mxu0 %v211
        %240 = vmatpush.msra.mxu0 %v210
        %241 = vmatmul.f32.gmra.mxu0 %v220
        %v242 = vpop.f32.mrf.mxu0
        %v243 = vadd.f32 %v216, %v242
        %244 = vmatmul.f32.gmra.mxu0 %v223
        %v245 = vpop.f32.mrf.mxu0
        %v246 = vadd.f32 %v216, %v245
        %247 = vdwg.mxu0
        %v248 = vmax.f32 %v243, 0.0
        %v249 = vmax.f32 %v246, 0.0
        %v252 = vrot.slane %v248, 2
        %v253 = vrot.slane %v248, 4
        %v254 = vrot.slane %v248, 6
        %v255 = vrot.slane %v249, 2
        %v256 = vrot.slane %v249, 4
        %v257 = vrot.slane %v249, 6
        %vm264 = vcmask 1041408
        %v265 = vsel %vm264, %v248, 0.0
        %v266 = vrot.slane %v265, 4
        %v267 = vadd.f32 %v265, %v266
        %v268 = vrot.slane %v267, 2
        %v269 = vadd.f32 %v267, %v268
        %v270 = vrot.slane %v269, 1
        %v271 = vadd.f32 %v269, %v270
        %v272 = vsel %vm264, %v252, 0.0
        %v273 = vrot.slane %v272, 4
        %v274 = vadd.f32 %v272, %v273
        %v275 = vrot.slane %v274, 2
        %v276 = vadd.f32 %v274, %v275
        %v277 = vrot.slane %v276, 1
        %v278 = vadd.f32 %v276, %v277
        %v279 = vsel %vm264, %v253, 0.0
        %v280 = vrot.slane %v279, 4
        %v281 = vadd.f32 %v279, %v280
        %v282 = vrot.slane %v281, 2
        %v283 = vadd.f32 %v281, %v282
        %v284 = vrot.slane %v283, 1
        %v285 = vadd.f32 %v283, %v284
        %v286 = vsel %vm264, %v254, 0.0
        %v287 = vrot.slane %v286, 4
        %v288 = vadd.f32 %v286, %v287
        %v289 = vrot.slane %v288, 2
        %v290 = vadd.f32 %v288, %v289
        %v291 = vrot.slane %v290, 1
        %v292 = vadd.f32 %v290, %v291
        %v293 = vsel %vm264, %v249, 0.0
        %v294 = vrot.slane %v293, 4
        %v295 = vadd.f32 %v293, %v294
        %v296 = vrot.slane %v295, 2
        %v297 = vadd.f32 %v295, %v296
        %v298 = vrot.slane %v297, 1
        %v299 = vadd.f32 %v297, %v298
        %v300 = vsel %vm264, %v255, 0.0
        %v301 = vrot.slane %v300, 4
        %v302 = vadd.f32 %v300, %v301
        %v303 = vrot.slane %v302, 2
        %v304 = vadd.f32 %v302, %v303
        %v305 = vrot.slane %v304, 1
        %v306 = vadd.f32 %v304, %v305
        %v307 = vsel %vm264, %v256, 0.0
        %v308 = vrot.slane %v307, 4
        %v309 = vadd.f32 %v307, %v308
        %v310 = vrot.slane %v309, 2
        %v311 = vadd.f32 %v309, %v310
        %v312 = vrot.slane %v311, 1
        %v313 = vadd.f32 %v311, %v312
        %v314 = vsel %vm264, %v257, 0.0
        %v315 = vrot.slane %v314, 4
        %v316 = vadd.f32 %v314, %v315
        %v317 = vrot.slane %v316, 2
        %v318 = vadd.f32 %v316, %v317
        %v319 = vrot.slane %v318, 1
        %v320 = vadd.f32 %v318, %v319
        %v321 = vmul.f32 %v271, 0.5
        %v322 = vmul.f32 %v278, 0.5
        %v323 = vmul.f32 %v285, 0.5
        %v324 = vmul.f32 %v292, 0.5
        %v325 = vmul.f32 %v299, 0.5
        %v326 = vmul.f32 %v306, 0.5
        %v327 = vmul.f32 %v313, 0.5
        %v328 = vmul.f32 %v320, 0.5
        %vm337 = vcmask 1041409
        %v338 = vsel %vm337, %v322, %v321
        %vm339 = vcmask 1042434
        %v340 = vsel %vm339, %v323, %v338
        %vm341 = vcmask 1043459
        %v342 = vsel %vm341, %v324, %v340
        %vm343 = vcmask 1044484
        %v344 = vsel %vm343, %v325, %v342
        %vm345 = vcmask 1045509
        %v346 = vsel %vm345, %v326, %v344
        %vm347 = vcmask 1046534
        %v348 = vsel %vm347, %v327, %v346
        %vm349 = vcmask 1047559
        %v350 = vsel %vm349, %v328, %v348
        %352 = vst [vmem:[%s207] sm:$0xff] %v350
        %s353 = sand.u32 %s97, 1
        %s354 = scalar_lea.sflag [#allocation4], %s353
        %s355 = sand.u32 %s97, 1
        %s356 = smul.addr %s355, 8
        %s357 = scalar_lea.vmem [#allocation7], %s356
        // Predicated region
        $region41: #{tpu_custom_call.1} parent=31 // pred_check
          %p358 = pneg %p107
        $region42: #{tpu_custom_call.1} parent=31 // pred_check_branch
          %360 = sbr.rel (%p358) target = $region44
        $region43: #{tpu_custom_call.1} parent=31 // pred_region
          %362 = vsyncadd %s354, 0
          %s363 = smul.addr %s21, 8
          %s364 = scalar_lea.hbm %s3, %s363
          %s366 = sshll.u32 %s357, 4
          %s367 = int_to_ptr.vmem [resolvable:$true] %s366
          %s368 = sshll.u32 %s364, 4
          %s369 = int_to_ptr.hbm [resolvable:$true] %s368
          %371 = dma.vmem_to_hbm [thread:$0]  %s367, 128, %s369, %s354
        $region44: #{tpu_custom_call.1} parent=31 // pred_fallthru
          _
      $region32: #{tpu_custom_call.1} parent=5 // pred_fallthru
        _
      %p372 = scmp.le.s32.totalorder 2, %s16
      // Predicated region
      $region45: #{tpu_custom_call.1} parent=5 // pred_check
        %p373 = pneg %p372
      $region46: #{tpu_custom_call.1} parent=5 // pred_check_branch
        %375 = sbr.rel (%p373) target = $region48
      $region47: #{tpu_custom_call.1} parent=5 // pred_region
        %s376 = ssub.s32 %s16, 2
        // Predicated region
        $region49: #{tpu_custom_call.1} parent=47 // pred_check
          %p377 = pneg %p113
        $region50: #{tpu_custom_call.1} parent=47 // pred_check_branch
          %379 = sbr.rel (%p377) target = $region52
        $region51: #{tpu_custom_call.1} parent=47 // pred_region
          %s380 = sand.u32 %s98, 1
          %s381 = scalar_lea.sflag [#allocation4], %s380
          %s382 = sand.u32 %s98, 1
          %s383 = smul.addr %s382, 8
          %s384 = scalar_lea.vmem [#allocation7], %s383
          %386 = dma.done %s381, 128
        $region52: #{tpu_custom_call.1} parent=47 // pred_fallthru
          _
      $region48: #{tpu_custom_call.1} parent=5 // pred_fallthru
        _
    $region6: #{tpu_custom_call.1} parent=1 // loop_footer
      %s20 = sadd.s32 1, %s16
    $region7: #{tpu_custom_call.1} parent=1 // loop_footer_branch
      %15 = sbr.rel target = $region3
    $region8: #{tpu_custom_call.1} parent=1 // loop_exit
      _
    %387 = vsyncpa [#allocation3], 1
    %s388 = scalar_lea.sflag [#allocation3], 1
    %389 = vsyncpa %s388, 1
    %390 = vsyncpa [#allocation6], 1
    %391 = vsyncpa [#allocation4], 1
    %s392 = scalar_lea.sflag [#allocation4], 1
    %393 = vsyncpa %s392, 1

</llo_original>
